<compile_context>
chip_gen: v6e
topology: v6e:2x2x1
jax: 0.10.0
libtpu: 0.0.40
codegen_flags: <defaults>
</compile_context>

<pallas_src>
import jax
import jax.numpy as jnp
from jax.experimental import pallas as pl
from jax.experimental.pallas import tpu as pltpu

_LANE = 128      # lane width  (last dim)
_SUBLANE = 8     # sublane width (second-to-last dim)


def _round_up(x, m):
    return (x + m - 1) // m * m


def _tpu_cores_and_vmem_cap():
    """(# TensorCores per chip, safe per-core VMEM cap in bytes)."""
    try:
        kind = jax.devices()[0].device_kind.lower()
    except Exception:
        kind = ""
    if "v7" in kind:
        return 2, 56 << 20          # v7x: 2 TCs/chip, 64 MiB VMEM per TC
    return 1, 100 << 20             # v5e / v6e: 1 TC, 128 MiB physical VMEM


def _pick_batch_tile(B, max_tile, min_steps):
    """Choose (batch_tile, padded_B), minimizing batch padding."""
    max_tile = max(_SUBLANE, (max_tile // _SUBLANE) * _SUBLANE)
    if B <= max_tile:
        # Optionally split so >= min_steps grid steps exist (v7x: feed both TCs).
        if min_steps > 1 and B % (min_steps * _SUBLANE) == 0 and B // min_steps >= _SUBLANE:
            return B // min_steps, B
        return B, B                 # single full-array tile: no pad, no (8,) constraint
    # Prefer a tile that divides B exactly (avoids a full HBM pass to pad x).
    if B % _SUBLANE == 0:
        for t in range(max_tile, max_tile // 2 - 1, -_SUBLANE):
            if B % t == 0:
                return t, B
    return max_tile, _round_up(B, max_tile)


def _pick_e_tile(Ep, max_e_tile):
    max_e_tile = max(_LANE, (max_e_tile // _LANE) * _LANE)
    if Ep <= max_e_tile:
        return Ep
    for t in range(max_e_tile, _LANE - 1, -_LANE):
        if Ep % t == 0:
            return t
    return _LANE


def _ae_kernel(x_ref, w1_ref, b1_ref, w2_ref, b2_ref, o_ref, acc_ref):
    e = pl.program_id(1)

    @pl.when(e == 0)
    def _init():
        acc_ref[...] = jnp.zeros_like(acc_ref)

    # encoder slice: Linear(D -> e_tile) + ReLU   (MXU matmul, f32 accumulation)
    xw = x_ref[...].astype(w1_ref.dtype)           # VPU cast, hidden under MXU/DMA
    h = jnp.dot(xw, w1_ref[...], preferred_element_type=jnp.float32)
    h = jnp.maximum(h + b1_ref[...], 0.0)
    # decoder slice: accumulate h_slice @ w2_slice into the f32 accumulator
    acc_ref[...] += jnp.dot(h.astype(w2_ref.dtype), w2_ref[...],
                            preferred_element_type=jnp.float32)

    @pl.when(e == pl.num_programs(1) - 1)
    def _finalize():
        o_ref[...] = (acc_ref[...] + b2_ref[...]).astype(o_ref.dtype)


def prepare_params(w1, b1, w2, b2, *, compute_dtype=jnp.bfloat16):
    """Pad feature dims to 128 lanes and cast weights ONCE (hoisted out of the
    per-call wrapper).  Weights use the (in, out) layout so the kernel computes
    x @ W directly (transposed vs PyTorch's (out, in) storage)."""
    D, E = w1.shape
    assert w2.shape == (E, D) and b1.shape == (1, E) and b2.shape == (1, D)
    Dp, Ep = _round_up(D, _LANE), _round_up(E, _LANE)
    if (Dp, Ep) != (D, E):
        w1 = jnp.pad(w1, ((0, Dp - D), (0, Ep - E)))
        b1 = jnp.pad(b1, ((0, 0), (0, Ep - E)))
        w2 = jnp.pad(w2, ((0, Ep - E), (0, Dp - D)))
        b2 = jnp.pad(b2, ((0, 0), (0, Dp - D)))
    # Biases stay f32: they are added to / alongside the f32 accumulator.
    return dict(w1=w1.astype(compute_dtype), b1=b1.astype(jnp.float32),
                w2=w2.astype(compute_dtype), b2=b2.astype(jnp.float32),
                D=D, E=E)


def autoencoder_forward(x, params, *, max_batch_tile=512, max_e_tile=2048):
    """Fused forward: y = relu(x @ w1 + b1) @ w2 + b2."""
    w1, b1, w2, b2 = params["w1"], params["b1"], params["w2"], params["b2"]
    D, E = params["D"], params["E"]
    B = x.shape[0]
    assert x.shape == (B, D)
    Dp, Ep = w1.shape
    out_dtype = x.dtype

    n_cores, vmem_cap = _tpu_cores_and_vmem_cap()
    batch_tile, Bp = _pick_batch_tile(B, max_batch_tile, n_cores)
    e_tile = _pick_e_tile(Ep, max_e_tile)
    e_steps = Ep // e_tile
    b_steps = Bp // batch_tile

    # Pad x only when unavoidable (D not a multiple of 128, or a ragged batch
    # larger than one tile).  For realistic dims this branch is a no-op and x
    # is streamed straight from HBM by the kernel pipeline.
    if Bp != B or Dp != D:
        x_in = jnp.pad(x, ((0, Bp - B), (0, Dp - D)))
    else:
        x_in = x

    w_bytes = jnp.dtype(w1.dtype).itemsize
    x_bytes = jnp.dtype(x_in.dtype).itemsize
    o_bytes = jnp.dtype(out_dtype).itemsize

    # VMEM budget per TensorCore: weight slabs (single- or double-buffered),
    # double-buffered x / out tiles, f32 accumulator, f32 h temp.
    w_buf = 1 if e_steps == 1 else 2
    est = (w_buf * (Dp * e_tile + e_tile * Dp) * w_bytes
           + w_buf * e_tile * 4 + 2 * Dp * 4
           + 2 * batch_tile * Dp * x_bytes
           + 2 * batch_tile * Dp * o_bytes
           + batch_tile * Dp * 4
           + batch_tile * e_tile * 4)
    vmem_limit = int(min(vmem_cap, max(32 << 20, int(est * 1.5))))

    cost = pl.CostEstimate(
        flops=4 * Bp * Dp * Ep,
        transcendentals=0,
        bytes_accessed=(x_in.size * x_bytes + Bp * Dp * o_bytes
                        + (w1.size + w2.size) * w_bytes
                        + (b1.size + b2.size) * 4))

    def _call(single_buffer):
        def wspec(shape, idx, invariant):
            # Grid-invariant operands only need ONE VMEM buffer.
            if single_buffer and invariant:
                return pl.BlockSpec(shape, idx, pipeline_mode=pl.Buffered(1))
            return pl.BlockSpec(shape, idx)

        w_inv = (e_steps == 1)
        grid_spec = pltpu.PrefetchScalarGridSpec(
            num_scalar_prefetch=0,
            grid=(b_steps, e_steps),
            in_specs=[
                pl.BlockSpec((batch_tile, Dp), lambda i, e: (i, 0)),   # x tile
                wspec((Dp, e_tile), lambda i, e: (0, e), w_inv),       # w1 slice
                wspec((1, e_tile), lambda i, e: (0, e), w_inv),        # b1 slice
                wspec((e_tile, Dp), lambda i, e: (e, 0), w_inv),       # w2 slice
                wspec((1, Dp), lambda i, e: (0, 0), True),             # b2
            ],
            out_specs=pl.BlockSpec((batch_tile, Dp), lambda i, e: (i, 0)),
            scratch_shapes=[pltpu.VMEM((batch_tile, Dp), jnp.float32)],
        )
        return pl.pallas_call(
            _ae_kernel,
            out_shape=jax.ShapeDtypeStruct((Bp, Dp), out_dtype),
            grid_spec=grid_spec,
            compiler_params=pltpu.CompilerParams(
                dimension_semantics=("parallel", "arbitrary"),
                vmem_limit_bytes=vmem_limit),
            cost_estimate=cost,
        )(x_in, w1, b1, w2, b2)

    try:
        out = _call(True)
    except Exception:
        # Fallback if this jax build rejects 1-deep pipelining (Buffered(1)).
        out = _call(False)

    return out[:B, :D] if (Bp, Dp) != (B, D) else out


def init_params(key, input_dim, encoding_dim):
    """PyTorch-Linear-style init (uniform(-1/sqrt(fan_in), +1/sqrt(fan_in)))."""
    k1, k2, k3, k4 = jax.random.split(key, 4)
    bound1 = 1.0 / (input_dim ** 0.5)
    bound2 = 1.0 / (encoding_dim ** 0.5)
    w1 = jax.random.uniform(k1, (input_dim, encoding_dim), jnp.float32, -bound1, bound1)
    b1 = jax.random.uniform(k2, (1, encoding_dim), jnp.float32, -bound1, bound1)
    w2 = jax.random.uniform(k3, (encoding_dim, input_dim), jnp.float32, -bound2, bound2)
    b2 = jax.random.uniform(k4, (1, input_dim), jnp.float32, -bound2, bound2)
    return w1, b1, w2, b2


def reference_forward(x, w1, b1, w2, b2):
    h = jnp.maximum(x @ w1 + b1, 0.0)
    return h @ w2 + b2


if __name__ == "__main__":
    key = jax.random.PRNGKey(0)
    kx, kp, kp2 = jax.random.split(key, 3)

    batch, input_dim, encoding_dim = 64, 32, 16
    x = jax.random.normal(kx, (batch, input_dim), jnp.float32)
    w1, b1, w2, b2 = init_params(kp, input_dim, encoding_dim)
    ref = reference_forward(x, w1, b1, w2, b2)

    # 1) Default path: bf16 weights (native MXU), f32 accumulation.
    params_bf16 = prepare_params(w1, b1, w2, b2)           # pad/cast once, hoisted
    out = jax.block_until_ready(autoencoder_forward(x, params_bf16))
    assert out.shape == (batch, input_dim)
    assert jnp.allclose(out, ref, atol=5e-2, rtol=5e-2)    # bf16 weight tolerance

    # 2) Exact f32 path.
    params_f32 = prepare_params(w1, b1, w2, b2, compute_dtype=jnp.float32)
    out32 = jax.block_until_ready(autoencoder_forward(x, params_f32))
    assert jnp.allclose(out32, ref, atol=1e-5, rtol=1e-5)

    # 3) Ragged multi-tile batch (exercises batch padding + multi-step grid).
    x2 = jax.random.normal(kx, (300, input_dim), jnp.float32)
    out2 = jax.block_until_ready(
        autoencoder_forward(x2, params_f32, max_batch_tile=128))
    assert jnp.allclose(out2, reference_forward(x2, w1, b1, w2, b2),
                        atol=1e-5, rtol=1e-5)

    # 4) Hidden-axis (E) reduction grid with multiple e steps + accumulator.
    d3, e3 = 40, 192
    x3 = jax.random.normal(kx, (24, d3), jnp.float32)
    w1c, b1c, w2c, b2c = init_params(kp2, d3, e3)
    params3 = prepare_params(w1c, b1c, w2c, b2c, compute_dtype=jnp.float32)
    out3 = jax.block_until_ready(
        autoencoder_forward(x3, params3, max_e_tile=128))
    assert jnp.allclose(out3, reference_forward(x3, w1c, b1c, w2c, b2c),
                        atol=1e-5, rtol=1e-5)

    print("KERNEL_OK")
</pallas_src>

<mosaic_0001>
module attributes {stable_mosaic.version = 11 : i64} {
  func.func @_ae_kernel(%arg0: i32, %arg1: i32, %arg2: memref<64x128xf32, #tpu.memory_space<vmem>>, %arg3: memref<128x128xbf16, #tpu.memory_space<vmem>>, %arg4: memref<1x128xf32, #tpu.memory_space<vmem>>, %arg5: memref<128x128xbf16, #tpu.memory_space<vmem>>, %arg6: memref<1x128xf32, #tpu.memory_space<vmem>>, %arg7: memref<64x128xf32, #tpu.memory_space<vmem>>, %arg8: memref<64x128xf32, #tpu.memory_space<vmem>>) attributes {dimension_semantics = [#tpu.dimension_semantics<parallel>, #tpu.dimension_semantics<arbitrary>], iteration_bounds = array<i64: 1, 1>, scalar_prefetch = 0 : i64, scratch_operands = 1 : i64, tpu.core_type = #tpu.core_type<tc>, window_params = [{transform_indices = @transform_0, window_bounds = array<i64: 64, 128>}, {pipeline_mode = #tpu.pipeline_mode<synchronous>, transform_indices = @transform_1, window_bounds = array<i64: 128, 128>}, {pipeline_mode = #tpu.pipeline_mode<synchronous>, transform_indices = @transform_2, window_bounds = array<i64: 1, 128>}, {pipeline_mode = #tpu.pipeline_mode<synchronous>, transform_indices = @transform_3, window_bounds = array<i64: 128, 128>}, {pipeline_mode = #tpu.pipeline_mode<synchronous>, transform_indices = @transform_4, window_bounds = array<i64: 1, 128>}, {transform_indices = @transform_5, window_bounds = array<i64: 64, 128>}]} {
    %c0_i32 = arith.constant 0 : i32
    %0 = arith.cmpi eq, %arg1, %c0_i32 : i32
    %1 = arith.extui %0 : i1 to i32
    %c0_i32_0 = arith.constant 0 : i32
    %2 = arith.cmpi ne, %1, %c0_i32_0 : i32
    scf.if %2 {
      %cst_16 = arith.constant 0.000000e+00 : f32
      %21 = vector.broadcast %cst_16 : f32 to vector<64x128xf32>
      %c0_17 = arith.constant 0 : index
      %c0_18 = arith.constant 0 : index
      %22 = vector.load %arg8[%c0_17, %c0_18] : memref<64x128xf32, #tpu.memory_space<vmem>>, vector<64x128xf32>
      tpu.vector_store %arg8[%c0_17, %c0_18], %21 {strides = array<i32>} : memref<64x128xf32, #tpu.memory_space<vmem>>, vector<64x128xf32>,
    } else {
    }
    %c0 = arith.constant 0 : index
    %c0_1 = arith.constant 0 : index
    %3 = vector.load %arg2[%c0, %c0_1] : memref<64x128xf32, #tpu.memory_space<vmem>>, vector<64x128xf32>
    %4 = arith.truncf %3 : vector<64x128xf32> to vector<64x128xbf16>
    %c0_2 = arith.constant 0 : index
    %c0_3 = arith.constant 0 : index
    %5 = vector.load %arg3[%c0_2, %c0_3] : memref<128x128xbf16, #tpu.memory_space<vmem>>, vector<128x128xbf16>
    %cst = arith.constant dense<0.000000e+00> : vector<64x128xf32>
    %6 = tpu.matmul %4, %5, %cst {dimension_numbers = #tpu.dot_dimension_numbers<[1], [0], [0], [1], [0, 0, 1, 1], [], []>} : vector<64x128xbf16>, vector<128x128xbf16>, vector<64x128xf32> -> vector<64x128xf32>
    %c0_4 = arith.constant 0 : index
    %c0_5 = arith.constant 0 : index
    %7 = vector.load %arg4[%c0_4, %c0_5] : memref<1x128xf32, #tpu.memory_space<vmem>>, vector<1x128xf32>
    %8 = vector.broadcast %7 : vector<1x128xf32> to vector<64x128xf32>
    %9 = arith.addf %6, %8 : vector<64x128xf32>
    %cst_6 = arith.constant 0.000000e+00 : f32
    %10 = vector.broadcast %cst_6 : f32 to vector<64x128xf32>
    %11 = arith.maximumf %9, %10 : vector<64x128xf32>
    %c0_7 = arith.constant 0 : index
    %c0_8 = arith.constant 0 : index
    %12 = vector.load %arg8[%c0_7, %c0_8] : memref<64x128xf32, #tpu.memory_space<vmem>>, vector<64x128xf32>
    %13 = arith.truncf %11 : vector<64x128xf32> to vector<64x128xbf16>
    %c0_9 = arith.constant 0 : index
    %c0_10 = arith.constant 0 : index
    %14 = vector.load %arg5[%c0_9, %c0_10] : memref<128x128xbf16, #tpu.memory_space<vmem>>, vector<128x128xbf16>
    %cst_11 = arith.constant dense<0.000000e+00> : vector<64x128xf32>
    %15 = tpu.matmul %13, %14, %cst_11 {dimension_numbers = #tpu.dot_dimension_numbers<[1], [0], [0], [1], [0, 0, 1, 1], [], []>} : vector<64x128xbf16>, vector<128x128xbf16>, vector<64x128xf32> -> vector<64x128xf32>
    %16 = arith.addf %12, %15 : vector<64x128xf32>
    %c0_12 = arith.constant 0 : index
    %c0_13 = arith.constant 0 : index
    %17 = vector.load %arg8[%c0_12, %c0_13] : memref<64x128xf32, #tpu.memory_space<vmem>>, vector<64x128xf32>
    tpu.vector_store %arg8[%c0_12, %c0_13], %16 {strides = array<i32>} : memref<64x128xf32, #tpu.memory_space<vmem>>, vector<64x128xf32>,
    %c0_i32_14 = arith.constant 0 : i32
    %18 = arith.cmpi eq, %arg1, %c0_i32_14 : i32
    %19 = arith.extui %18 : i1 to i32
    %c0_i32_15 = arith.constant 0 : i32
    %20 = arith.cmpi ne, %19, %c0_i32_15 : i32
    scf.if %20 {
      %c0_16 = arith.constant 0 : index
      %c0_17 = arith.constant 0 : index
      %21 = vector.load %arg8[%c0_16, %c0_17] : memref<64x128xf32, #tpu.memory_space<vmem>>, vector<64x128xf32>
      %c0_18 = arith.constant 0 : index
      %c0_19 = arith.constant 0 : index
      %22 = vector.load %arg6[%c0_18, %c0_19] : memref<1x128xf32, #tpu.memory_space<vmem>>, vector<1x128xf32>
      %23 = vector.broadcast %22 : vector<1x128xf32> to vector<64x128xf32>
      %24 = arith.addf %21, %23 : vector<64x128xf32>
      %c0_20 = arith.constant 0 : index
      %c0_21 = arith.constant 0 : index
      %25 = vector.load %arg7[%c0_20, %c0_21] : memref<64x128xf32, #tpu.memory_space<vmem>>, vector<64x128xf32>
      tpu.vector_store %arg7[%c0_20, %c0_21], %24 {strides = array<i32>} : memref<64x128xf32, #tpu.memory_space<vmem>>, vector<64x128xf32>,
    } else {
    }
    return
  }
  func.func @transform_0(%arg0: i32, %arg1: i32) -> (i32, i32) {
    %c0_i32 = arith.constant 0 : i32
    %c0_i32_0 = arith.constant 0 : i32
    return %arg0, %c0_i32 : i32, i32
  }
  func.func @transform_1(%arg0: i32, %arg1: i32) -> (i32, i32) {
    %c0_i32 = arith.constant 0 : i32
    %c0_i32_0 = arith.constant 0 : i32
    return %c0_i32, %arg1 : i32, i32
  }
  func.func @transform_2(%arg0: i32, %arg1: i32) -> (i32, i32) {
    %c0_i32 = arith.constant 0 : i32
    %c0_i32_0 = arith.constant 0 : i32
    return %c0_i32, %arg1 : i32, i32
  }
  func.func @transform_3(%arg0: i32, %arg1: i32) -> (i32, i32) {
    %c0_i32 = arith.constant 0 : i32
    %c0_i32_0 = arith.constant 0 : i32
    return %arg1, %c0_i32 : i32, i32
  }
  func.func @transform_4(%arg0: i32, %arg1: i32) -> (i32, i32) {
    %c0_i32 = arith.constant 0 : i32
    %c0_i32_0 = arith.constant 0 : i32
    %c0_i32_1 = arith.constant 0 : i32
    return %c0_i32, %c0_i32_0 : i32, i32
  }
  func.func @transform_5(%arg0: i32, %arg1: i32) -> (i32, i32) {
    %c0_i32 = arith.constant 0 : i32
    %c0_i32_0 = arith.constant 0 : i32
    return %arg0, %c0_i32 : i32, i32
  }
}

module attributes {stable_mosaic.version = 11 : i64} {
  func.func @_ae_kernel(%arg0: i32, %arg1: i32, %arg2: memref<64x128xf32, #tpu.memory_space<vmem>>, %arg3: memref<128x128xbf16, #tpu.memory_space<vmem>>, %arg4: memref<1x128xf32, #tpu.memory_space<vmem>>, %arg5: memref<128x128xbf16, #tpu.memory_space<vmem>>, %arg6: memref<1x128xf32, #tpu.memory_space<vmem>>, %arg7: memref<64x128xf32, #tpu.memory_space<vmem>>, %arg8: memref<64x128xf32, #tpu.memory_space<vmem>>) attributes {dimension_semantics = [#tpu.dimension_semantics<parallel>, #tpu.dimension_semantics<arbitrary>], iteration_bounds = array<i64: 1, 1>, scalar_prefetch = 0 : i64, scratch_operands = 1 : i64, tpu.core_type = #tpu.core_type<tc>, window_params = [{transform_indices = @transform_0, window_bounds = array<i64: 64, 128>}, {transform_indices = @transform_1, window_bounds = array<i64: 128, 128>}, {transform_indices = @transform_2, window_bounds = array<i64: 1, 128>}, {transform_indices = @transform_3, window_bounds = array<i64: 128, 128>}, {pipeline_mode = #tpu.pipeline_mode<synchronous>, transform_indices = @transform_4, window_bounds = array<i64: 1, 128>}, {transform_indices = @transform_5, window_bounds = array<i64: 64, 128>}]} {
    %c0_i32 = arith.constant 0 : i32
    %0 = arith.cmpi eq, %arg1, %c0_i32 : i32
    %1 = arith.extui %0 : i1 to i32
    %c0_i32_0 = arith.constant 0 : i32
    %2 = arith.cmpi ne, %1, %c0_i32_0 : i32
    scf.if %2 {
      %cst_16 = arith.constant 0.000000e+00 : f32
      %21 = vector.broadcast %cst_16 : f32 to vector<64x128xf32>
      %c0_17 = arith.constant 0 : index
      %c0_18 = arith.constant 0 : index
      %22 = vector.load %arg8[%c0_17, %c0_18] : memref<64x128xf32, #tpu.memory_space<vmem>>, vector<64x128xf32>
      tpu.vector_store %arg8[%c0_17, %c0_18], %21 {strides = array<i32>} : memref<64x128xf32, #tpu.memory_space<vmem>>, vector<64x128xf32>,
    } else {
    }
    %c0 = arith.constant 0 : index
    %c0_1 = arith.constant 0 : index
    %3 = vector.load %arg2[%c0, %c0_1] : memref<64x128xf32, #tpu.memory_space<vmem>>, vector<64x128xf32>
    %4 = arith.truncf %3 : vector<64x128xf32> to vector<64x128xbf16>
    %c0_2 = arith.constant 0 : index
    %c0_3 = arith.constant 0 : index
    %5 = vector.load %arg3[%c0_2, %c0_3] : memref<128x128xbf16, #tpu.memory_space<vmem>>, vector<128x128xbf16>
    %cst = arith.constant dense<0.000000e+00> : vector<64x128xf32>
    %6 = tpu.matmul %4, %5, %cst {dimension_numbers = #tpu.dot_dimension_numbers<[1], [0], [0], [1], [0, 0, 1, 1], [], []>} : vector<64x128xbf16>, vector<128x128xbf16>, vector<64x128xf32> -> vector<64x128xf32>
    %c0_4 = arith.constant 0 : index
    %c0_5 = arith.constant 0 : index
    %7 = vector.load %arg4[%c0_4, %c0_5] : memref<1x128xf32, #tpu.memory_space<vmem>>, vector<1x128xf32>
    %8 = vector.broadcast %7 : vector<1x128xf32> to vector<64x128xf32>
    %9 = arith.addf %6, %8 : vector<64x128xf32>
    %cst_6 = arith.constant 0.000000e+00 : f32
    %10 = vector.broadcast %cst_6 : f32 to vector<64x128xf32>
    %11 = arith.maximumf %9, %10 : vector<64x128xf32>
    %c0_7 = arith.constant 0 : index
    %c0_8 = arith.constant 0 : index
    %12 = vector.load %arg8[%c0_7, %c0_8] : memref<64x128xf32, #tpu.memory_space<vmem>>, vector<64x128xf32>
    %13 = arith.truncf %11 : vector<64x128xf32> to vector<64x128xbf16>
    %c0_9 = arith.constant 0 : index
    %c0_10 = arith.constant 0 : index
    %14 = vector.load %arg5[%c0_9, %c0_10] : memref<128x128xbf16, #tpu.memory_space<vmem>>, vector<128x128xbf16>
    %cst_11 = arith.constant dense<0.000000e+00> : vector<64x128xf32>
    %15 = tpu.matmul %13, %14, %cst_11 {dimension_numbers = #tpu.dot_dimension_numbers<[1], [0], [0], [1], [0, 0, 1, 1], [], []>} : vector<64x128xbf16>, vector<128x128xbf16>, vector<64x128xf32> -> vector<64x128xf32>
    %16 = arith.addf %12, %15 : vector<64x128xf32>
    %c0_12 = arith.constant 0 : index
    %c0_13 = arith.constant 0 : index
    %17 = vector.load %arg8[%c0_12, %c0_13] : memref<64x128xf32, #tpu.memory_space<vmem>>, vector<64x128xf32>
    tpu.vector_store %arg8[%c0_12, %c0_13], %16 {strides = array<i32>} : memref<64x128xf32, #tpu.memory_space<vmem>>, vector<64x128xf32>,
    %c0_i32_14 = arith.constant 0 : i32
    %18 = arith.cmpi eq, %arg1, %c0_i32_14 : i32
    %19 = arith.extui %18 : i1 to i32
    %c0_i32_15 = arith.constant 0 : i32
    %20 = arith.cmpi ne, %19, %c0_i32_15 : i32
    scf.if %20 {
      %c0_16 = arith.constant 0 : index
      %c0_17 = arith.constant 0 : index
      %21 = vector.load %arg8[%c0_16, %c0_17] : memref<64x128xf32, #tpu.memory_space<vmem>>, vector<64x128xf32>
      %c0_18 = arith.constant 0 : index
      %c0_19 = arith.constant 0 : index
      %22 = vector.load %arg6[%c0_18, %c0_19] : memref<1x128xf32, #tpu.memory_space<vmem>>, vector<1x128xf32>
      %23 = vector.broadcast %22 : vector<1x128xf32> to vector<64x128xf32>
      %24 = arith.addf %21, %23 : vector<64x128xf32>
      %c0_20 = arith.constant 0 : index
      %c0_21 = arith.constant 0 : index
      %25 = vector.load %arg7[%c0_20, %c0_21] : memref<64x128xf32, #tpu.memory_space<vmem>>, vector<64x128xf32>
      tpu.vector_store %arg7[%c0_20, %c0_21], %24 {strides = array<i32>} : memref<64x128xf32, #tpu.memory_space<vmem>>, vector<64x128xf32>,
    } else {
    }
    return
  }
  func.func @transform_0(%arg0: i32, %arg1: i32) -> (i32, i32) {
    %c0_i32 = arith.constant 0 : i32
    %c0_i32_0 = arith.constant 0 : i32
    return %arg0, %c0_i32 : i32, i32
  }
  func.func @transform_1(%arg0: i32, %arg1: i32) -> (i32, i32) {
    %c0_i32 = arith.constant 0 : i32
    %c0_i32_0 = arith.constant 0 : i32
    return %c0_i32, %arg1 : i32, i32
  }
  func.func @transform_2(%arg0: i32, %arg1: i32) -> (i32, i32) {
    %c0_i32 = arith.constant 0 : i32
    %c0_i32_0 = arith.constant 0 : i32
    return %c0_i32, %arg1 : i32, i32
  }
  func.func @transform_3(%arg0: i32, %arg1: i32) -> (i32, i32) {
    %c0_i32 = arith.constant 0 : i32
    %c0_i32_0 = arith.constant 0 : i32
    return %arg1, %c0_i32 : i32, i32
  }
  func.func @transform_4(%arg0: i32, %arg1: i32) -> (i32, i32) {
    %c0_i32 = arith.constant 0 : i32
    %c0_i32_0 = arith.constant 0 : i32
    %c0_i32_1 = arith.constant 0 : i32
    return %c0_i32, %c0_i32_0 : i32, i32
  }
  func.func @transform_5(%arg0: i32, %arg1: i32) -> (i32, i32) {
    %c0_i32 = arith.constant 0 : i32
    %c0_i32_0 = arith.constant 0 : i32
    return %arg0, %c0_i32 : i32, i32
  }
}

</mosaic_0001>

<llo_original>
// kernel: tpu_custom_call.1
$region0: #{tpu_custom_call.1}
  #allocation0 [shape = 'u32[]', space=smem, size = 0x4, offset = 0x4, fixed_abs, tag = 'smem constant byte address 0x4 - core index']
  #allocation1 [shape = 'u32[144,128]{1,0:T(1,128)}', space=vmem, size = 0x12000, scoped, tag = 'internal scratch']
  #allocation2 [shape = 'f32[64,128]{1,0:T(8,128)}', space=vmem, size = 0x8000, scoped, tag = 'scratch operand']
  %s0 = inlined_call_operand.hbm [shape: f32[64,128], index: 0, kind: input, shape index: {}]
  %s1 = inlined_call_operand.hbm [shape: bf16[128,128], index: 1, kind: input, shape index: {}]
  %s2 = inlined_call_operand.vmem [shape: f32[1,128], index: 2, kind: input, shape index: {}]
  %s3 = inlined_call_operand.hbm [shape: bf16[128,128], index: 3, kind: input, shape index: {}]
  %s4 = inlined_call_operand.vmem [shape: f32[1,128], index: 4, kind: input, shape index: {}]
  %s5 = inlined_call_operand.hbm [shape: f32[64,128], index: 5, kind: output, shape index: {}]
  %s6 = sld [smem:[#allocation0]]
  $region50: #{tpu_custom_call.1} parent=0
    _
  %s8 = ssub.s32 1, %s6
  %s9 = scalar_select 0, %s8, %s6
  $region1: #{tpu_custom_call.1} parent=0
    #allocation3 [shape = 'u8[32768]{0}', space=vmem, size = 0x8000, scoped, tag = 'input window, operand 0, single buffered']
    #allocation4 [shape = 's32[1]{0}', space=sflag, size = 0x4, scoped, tag = 'scoped memory for tpu_custom_call.1']
    #allocation5 [shape = 's32[1]{0}', space=sflag, size = 0x4, scoped, tag = 'scoped memory for tpu_custom_call.1']
    #allocation6 [shape = 'u8[32768]{0}', space=vmem, size = 0x8000, scoped, tag = 'input window, operand 1, single buffered']
    #allocation7 [shape = 's32[1]{0}', space=sflag, size = 0x4, scoped, tag = 'scoped memory for tpu_custom_call.1']
    #allocation8 [shape = 'u8[32768]{0}', space=vmem, size = 0x8000, scoped, tag = 'input window, operand 3, single buffered']
    #allocation9 [shape = 'u8[32768]{0}', space=vmem, size = 0x8000, scoped, tag = 'output window, operand 0, single buffered']
    %10 = vsyncpa [#allocation4], 0
    %11 = vsyncpa [#allocation7], 0
    %12 = vsyncpa [#allocation5], 0
    // Predicated region
    $region2: #{tpu_custom_call.1} parent=1 // pred_check
      _
    $region3: #{tpu_custom_call.1} parent=1 // pred_check_branch
      %14 = sbr.rel (0) target = $region5
    $region4: #{tpu_custom_call.1} parent=1 // pred_region
      %s16 = ssub.s32 1024, 1024
      %17 = vsyncadd [#allocation4], %s16
      %s18 = sshll.u32 [#allocation3], 4
      %s19 = int_to_ptr.vmem [resolvable:$true] %s18
      %24 = dma.hbm_to_vmem [thread:$0]  %s0, 1024, %s19, [#allocation4], 128, 128, 8
    $region5: #{tpu_custom_call.1} parent=1 // pred_fallthru
      _
    // Predicated region
    $region6: #{tpu_custom_call.1} parent=1 // pred_check
      _
    $region7: #{tpu_custom_call.1} parent=1 // pred_check_branch
      %26 = sbr.rel (0) target = $region9
    $region8: #{tpu_custom_call.1} parent=1 // pred_region
      %s28 = ssub.s32 1024, 1024
      %29 = vsyncadd [#allocation7], %s28
      %s30 = sshll.u32 [#allocation6], 4
      %s31 = int_to_ptr.vmem [resolvable:$true] %s30
      %36 = dma.hbm_to_vmem [thread:$0]  %s1, 1024, %s31, [#allocation7], 64, 64, 4
    $region9: #{tpu_custom_call.1} parent=1 // pred_fallthru
      _
    // Predicated region
    $region10: #{tpu_custom_call.1} parent=1 // pred_check
      _
    $region11: #{tpu_custom_call.1} parent=1 // pred_check_branch
      %38 = sbr.rel (0) target = $region13
    $region12: #{tpu_custom_call.1} parent=1 // pred_region
      _
    $region13: #{tpu_custom_call.1} parent=1 // pred_fallthru
      _
    // Predicated region
    $region14: #{tpu_custom_call.1} parent=1 // pred_check
      _
    $region15: #{tpu_custom_call.1} parent=1 // pred_check_branch
      %40 = sbr.rel (0) target = $region17
    $region16: #{tpu_custom_call.1} parent=1 // pred_region
      %s42 = ssub.s32 1024, 1024
      %43 = vsyncadd [#allocation7], %s42
      %s44 = sshll.u32 [#allocation8], 4
      %s45 = int_to_ptr.vmem [resolvable:$true] %s44
      %50 = dma.hbm_to_vmem [thread:$0]  %s3, 1024, %s45, [#allocation7], 64, 64, 4
    $region17: #{tpu_custom_call.1} parent=1 // pred_fallthru
      _
    // Predicated region
    $region18: #{tpu_custom_call.1} parent=1 // pred_check
      _
    $region19: #{tpu_custom_call.1} parent=1 // pred_check_branch
      %52 = sbr.rel (0) target = $region21
    $region20: #{tpu_custom_call.1} parent=1 // pred_region
      _
    $region21: #{tpu_custom_call.1} parent=1 // pred_fallthru
      _
    // Predicated region
    $region22: #{tpu_custom_call.1} parent=1 // pred_check
      _
    $region23: #{tpu_custom_call.1} parent=1 // pred_check_branch
      %54 = sbr.rel (0) target = $region25
    $region24: #{tpu_custom_call.1} parent=1 // pred_region
      %55 = dma.done [#allocation4], 1024
    $region25: #{tpu_custom_call.1} parent=1 // pred_fallthru
      _
    // Predicated region
    $region26: #{tpu_custom_call.1} parent=1 // pred_check
      _
    $region27: #{tpu_custom_call.1} parent=1 // pred_check_branch
      %57 = sbr.rel (0) target = $region29
    $region28: #{tpu_custom_call.1} parent=1 // pred_region
      %58 = dma.done [#allocation7], 1024
    $region29: #{tpu_custom_call.1} parent=1 // pred_fallthru
      _
    // Predicated region
    $region30: #{tpu_custom_call.1} parent=1 // pred_check
      _
    $region31: #{tpu_custom_call.1} parent=1 // pred_check_branch
      %60 = sbr.rel (0) target = $region33
    $region32: #{tpu_custom_call.1} parent=1 // pred_region
      %61 = dma.done [#allocation7], 1024
    $region33: #{tpu_custom_call.1} parent=1 // pred_fallthru
      _
    %p63 = scmp.eq.s32.totalorder 0, 0
    // Predicated region
    $region34: #{tpu_custom_call.1} parent=1 // pred_check
      %p64 = pneg %p63
    $region35: #{tpu_custom_call.1} parent=1 // pred_check_branch
      %66 = sbr.rel (%p64) target = $region37
    $region36: #{tpu_custom_call.1} parent=1 // pred_region
      %67 = vst [vmem:[#allocation2] sm:$0xff] 0.0
      %68 = vst [vmem:[#allocation2 + $0x8] sm:$0xff] 0.0
      %69 = vst [vmem:[#allocation2 + $0x10] sm:$0xff] 0.0
      %70 = vst [vmem:[#allocation2 + $0x18] sm:$0xff] 0.0
      %71 = vst [vmem:[#allocation2 + $0x20] sm:$0xff] 0.0
      %72 = vst [vmem:[#allocation2 + $0x28] sm:$0xff] 0.0
      %73 = vst [vmem:[#allocation2 + $0x30] sm:$0xff] 0.0
      %74 = vst [vmem:[#allocation2 + $0x38] sm:$0xff] 0.0
    $region37: #{tpu_custom_call.1} parent=1 // pred_fallthru
      _
    %v75 = vld [vmem:[#allocation3] sm:$0xff]
    %v76 = vld [vmem:[#allocation3 + $0x8] sm:$0xff]
    %v77 = vld [vmem:[#allocation3 + $0x10] sm:$0xff]
    %v78 = vld [vmem:[#allocation3 + $0x18] sm:$0xff]
    %v79 = vld [vmem:[#allocation3 + $0x20] sm:$0xff]
    %v80 = vld [vmem:[#allocation3 + $0x28] sm:$0xff]
    %v81 = vld [vmem:[#allocation3 + $0x30] sm:$0xff]
    %v82 = vld [vmem:[#allocation3 + $0x38] sm:$0xff]
    %v83 = vpack.c.bf16 %v76, %v75
    %v84 = vpack.c.bf16 %v78, %v77
    %v85 = vpack.c.bf16 %v80, %v79
    %v86 = vpack.c.bf16 %v82, %v81
    %v87 = vld [vmem:[#allocation6] sm:$0xf]
    %v88 = vld [vmem:[#allocation6 + $0x4] sm:$0xf]
    %v89 = vld [vmem:[#allocation6 + $0x8] sm:$0xf]
    %v90 = vld [vmem:[#allocation6 + $0xc] sm:$0xf]
    %v91 = vld [vmem:[#allocation6 + $0x10] sm:$0xf]
    %v92 = vld [vmem:[#allocation6 + $0x14] sm:$0xf]
    %v93 = vld [vmem:[#allocation6 + $0x18] sm:$0xf]
    %v94 = vld [vmem:[#allocation6 + $0x1c] sm:$0xf]
    %v95 = vld [vmem:[#allocation6 + $0x20] sm:$0xf]
    %v96 = vld [vmem:[#allocation6 + $0x24] sm:$0xf]
    %v97 = vld [vmem:[#allocation6 + $0x28] sm:$0xf]
    %v98 = vld [vmem:[#allocation6 + $0x2c] sm:$0xf]
    %v99 = vld [vmem:[#allocation6 + $0x30] sm:$0xf]
    %v100 = vld [vmem:[#allocation6 + $0x34] sm:$0xf]
    %v101 = vld [vmem:[#allocation6 + $0x38] sm:$0xf]
    %v102 = vld [vmem:[#allocation6 + $0x3c] sm:$0xf]
    %v103 = vld [vmem:[%s2] sm:$0x1]
    %v105 = vlaneseq
    %v106 = vshrl.u32 %v105, 7
    %v107 = vsub.s32 0, %v106
    %v108 = vrot.slane %v103, %v107
    %v126 = vunpack.c.l.b16 %v87
    %v127 = vunpack.c.l.b16 %v88
    %v128 = vunpack.c.l.b16 %v89
    %v129 = vunpack.c.l.b16 %v90
    %v130 = vunpack.c.l.b16 %v91
    %v131 = vunpack.c.l.b16 %v92
    %v132 = vunpack.c.l.b16 %v93
    %v133 = vunpack.c.l.b16 %v94
    %v134 = vunpack.c.l.b16 %v95
    %v135 = vunpack.c.l.b16 %v96
    %v136 = vunpack.c.l.b16 %v97
    %v137 = vunpack.c.l.b16 %v98
    %v138 = vunpack.c.l.b16 %v99
    %v139 = vunpack.c.l.b16 %v100
    %v140 = vunpack.c.l.b16 %v101
    %v141 = vunpack.c.l.b16 %v102
    %v142 = vpack.c.b16 %v127, %v126
    %v143 = vpack.c.b16 %v129, %v128
    %v144 = vpack.c.b16 %v131, %v130
    %v145 = vpack.c.b16 %v133, %v132
    %v146 = vpack.c.b16 %v135, %v134
    %v147 = vpack.c.b16 %v137, %v136
    %v148 = vpack.c.b16 %v139, %v138
    %v149 = vpack.c.b16 %v141, %v140
    %158 = vmatprep.subr.bf16.mxu0 0
    %159 = vmatpush1.bf16.msra.mxu0 %v149
    %160 = vmatprep.subr.bf16.mxu0 0
    %161 = vmatpush1.bf16.msra.mxu0 %v148
    %162 = vmatprep.subr.bf16.mxu0 0
    %163 = vmatpush1.bf16.msra.mxu0 %v147
    %164 = vmatprep.subr.bf16.mxu0 0
    %165 = vmatpush1.bf16.msra.mxu0 %v146
    %166 = vmatprep.subr.bf16.mxu0 0
    %167 = vmatpush1.bf16.msra.mxu0 %v145
    %168 = vmatprep.subr.bf16.mxu0 0
    %169 = vmatpush1.bf16.msra.mxu0 %v144
    %170 = vmatprep.subr.bf16.mxu0 0
    %171 = vmatpush1.bf16.msra.mxu0 %v143
    %172 = vmatprep.subr.bf16.mxu0 0
    %173 = vmatpush1.bf16.msra.mxu0 %v142
    %174 = vmatprep.subr.bf16.mxu0 0
    %175 = vmatpush2.bf16.msra.mxu0 0
    %176 = vmatprep.subr.bf16.mxu0 0
    %177 = vmatpush2.bf16.msra.mxu0 0
    %178 = vmatprep.subr.bf16.mxu0 0
    %179 = vmatpush2.bf16.msra.mxu0 0
    %180 = vmatprep.subr.bf16.mxu0 0
    %181 = vmatpush2.bf16.msra.mxu0 0
    %182 = vmatprep.subr.bf16.mxu0 0
    %183 = vmatpush2.bf16.msra.mxu0 0
    %184 = vmatprep.subr.bf16.mxu0 0
    %185 = vmatpush2.bf16.msra.mxu0 0
    %186 = vmatprep.subr.bf16.mxu0 0
    %187 = vmatpush2.bf16.msra.mxu0 0
    %188 = vmatprep.subr.bf16.mxu0 0
    %189 = vmatpush2.bf16.msra.mxu0 0
    %190 = vmatprep.mubr.bf16.mxu0 0
    %191 = vmatmul.mubr.bf16.gmra.mxu0 %v83
    %v192 = vpop.f32.mrf.mxu0
    %v193 = vadd.f32 %v108, %v192
    %v194 = vpop.f32.mrf.mxu0
    %v195 = vpop.f32.mrf.mxu0
    %v196 = vadd.f32 %v108, %v195
    %v197 = vpop.f32.mrf.mxu0
    %198 = vmatprep.mubr.bf16.mxu0 0
    %199 = vmatmul.mubr.bf16.gmra.mxu0 %v84
    %v200 = vpop.f32.mrf.mxu0
    %v201 = vadd.f32 %v108, %v200
    %v202 = vpop.f32.mrf.mxu0
    %v203 = vpop.f32.mrf.mxu0
    %v204 = vadd.f32 %v108, %v203
    %v205 = vpop.f32.mrf.mxu0
    %206 = vmatprep.mubr.bf16.mxu0 0
    %207 = vmatmul.mubr.bf16.gmra.mxu0 %v85
    %v208 = vpop.f32.mrf.mxu0
    %v209 = vadd.f32 %v108, %v208
    %v210 = vpop.f32.mrf.mxu0
    %v211 = vpop.f32.mrf.mxu0
    %v212 = vadd.f32 %v108, %v211
    %v213 = vpop.f32.mrf.mxu0
    %214 = vmatprep.mubr.bf16.mxu0 0
    %215 = vmatmul.mubr.bf16.gmra.mxu0 %v86
    %v216 = vpop.f32.mrf.mxu0
    %v217 = vadd.f32 %v108, %v216
    %v218 = vpop.f32.mrf.mxu0
    %v219 = vpop.f32.mrf.mxu0
    %v220 = vadd.f32 %v108, %v219
    %v221 = vpop.f32.mrf.mxu0
    %222 = vdwg.mxu0
    %v223 = vmax.f32 %v193, 0.0
    %v224 = vmax.f32 %v196, 0.0
    %v225 = vmax.f32 %v201, 0.0
    %v226 = vmax.f32 %v204, 0.0
    %v227 = vmax.f32 %v209, 0.0
    %v228 = vmax.f32 %v212, 0.0
    %v229 = vmax.f32 %v217, 0.0
    %v230 = vmax.f32 %v220, 0.0
    %v231 = vld [vmem:[#allocation2] sm:$0xff]
    %v232 = vld [vmem:[#allocation2 + $0x8] sm:$0xff]
    %v233 = vld [vmem:[#allocation2 + $0x10] sm:$0xff]
    %v234 = vld [vmem:[#allocation2 + $0x18] sm:$0xff]
    %v235 = vld [vmem:[#allocation2 + $0x20] sm:$0xff]
    %v236 = vld [vmem:[#allocation2 + $0x28] sm:$0xff]
    %v237 = vld [vmem:[#allocation2 + $0x30] sm:$0xff]
    %v238 = vld [vmem:[#allocation2 + $0x38] sm:$0xff]
    %v239 = vpack.c.bf16 %v224, %v223
    %v240 = vpack.c.bf16 %v226, %v225
    %v241 = vpack.c.bf16 %v228, %v227
    %v242 = vpack.c.bf16 %v230, %v229
    %v243 = vld [vmem:[#allocation8] sm:$0xf]
    %v244 = vld [vmem:[#allocation8 + $0x4] sm:$0xf]
    %v245 = vld [vmem:[#allocation8 + $0x8] sm:$0xf]
    %v246 = vld [vmem:[#allocation8 + $0xc] sm:$0xf]
    %v247 = vld [vmem:[#allocation8 + $0x10] sm:$0xf]
    %v248 = vld [vmem:[#allocation8 + $0x14] sm:$0xf]
    %v249 = vld [vmem:[#allocation8 + $0x18] sm:$0xf]
    %v250 = vld [vmem:[#allocation8 + $0x1c] sm:$0xf]
    %v251 = vld [vmem:[#allocation8 + $0x20] sm:$0xf]
    %v252 = vld [vmem:[#allocation8 + $0x24] sm:$0xf]
    %v253 = vld [vmem:[#allocation8 + $0x28] sm:$0xf]
    %v254 = vld [vmem:[#allocation8 + $0x2c] sm:$0xf]
    %v255 = vld [vmem:[#allocation8 + $0x30] sm:$0xf]
    %v256 = vld [vmem:[#allocation8 + $0x34] sm:$0xf]
    %v257 = vld [vmem:[#allocation8 + $0x38] sm:$0xf]
    %v258 = vld [vmem:[#allocation8 + $0x3c] sm:$0xf]
    %v275 = vunpack.c.l.b16 %v243
    %v276 = vunpack.c.l.b16 %v244
    %v277 = vunpack.c.l.b16 %v245
    %v278 = vunpack.c.l.b16 %v246
    %v279 = vunpack.c.l.b16 %v247
    %v280 = vunpack.c.l.b16 %v248
    %v281 = vunpack.c.l.b16 %v249
    %v282 = vunpack.c.l.b16 %v250
    %v283 = vunpack.c.l.b16 %v251
    %v284 = vunpack.c.l.b16 %v252
    %v285 = vunpack.c.l.b16 %v253
    %v286 = vunpack.c.l.b16 %v254
    %v287 = vunpack.c.l.b16 %v255
    %v288 = vunpack.c.l.b16 %v256
    %v289 = vunpack.c.l.b16 %v257
    %v290 = vunpack.c.l.b16 %v258
    %v291 = vpack.c.b16 %v276, %v275
    %v292 = vpack.c.b16 %v278, %v277
    %v293 = vpack.c.b16 %v280, %v279
    %v294 = vpack.c.b16 %v282, %v281
    %v295 = vpack.c.b16 %v284, %v283
    %v296 = vpack.c.b16 %v286, %v285
    %v297 = vpack.c.b16 %v288, %v287
    %v298 = vpack.c.b16 %v290, %v289
    %307 = vmatprep.subr.bf16.mxu0 0
    %308 = vmatpush1.bf16.msra.mxu0 %v298
    %309 = vmatprep.subr.bf16.mxu0 0
    %310 = vmatpush1.bf16.msra.mxu0 %v297
    %311 = vmatprep.subr.bf16.mxu0 0
    %312 = vmatpush1.bf16.msra.mxu0 %v296
    %313 = vmatprep.subr.bf16.mxu0 0
    %314 = vmatpush1.bf16.msra.mxu0 %v295
    %315 = vmatprep.subr.bf16.mxu0 0
    %316 = vmatpush1.bf16.msra.mxu0 %v294
    %317 = vmatprep.subr.bf16.mxu0 0
    %318 = vmatpush1.bf16.msra.mxu0 %v293
    %319 = vmatprep.subr.bf16.mxu0 0
    %320 = vmatpush1.bf16.msra.mxu0 %v292
    %321 = vmatprep.subr.bf16.mxu0 0
    %322 = vmatpush1.bf16.msra.mxu0 %v291
    %323 = vmatprep.subr.bf16.mxu0 0
    %324 = vmatpush2.bf16.msra.mxu0 0
    %325 = vmatprep.subr.bf16.mxu0 0
    %326 = vmatpush2.bf16.msra.mxu0 0
    %327 = vmatprep.subr.bf16.mxu0 0
    %328 = vmatpush2.bf16.msra.mxu0 0
    %329 = vmatprep.subr.bf16.mxu0 0
    %330 = vmatpush2.bf16.msra.mxu0 0
    %331 = vmatprep.subr.bf16.mxu0 0
    %332 = vmatpush2.bf16.msra.mxu0 0
    %333 = vmatprep.subr.bf16.mxu0 0
    %334 = vmatpush2.bf16.msra.mxu0 0
    %335 = vmatprep.subr.bf16.mxu0 0
    %336 = vmatpush2.bf16.msra.mxu0 0
    %337 = vmatprep.subr.bf16.mxu0 0
    %338 = vmatpush2.bf16.msra.mxu0 0
    %339 = vmatprep.mubr.bf16.mxu0 0
    %340 = vmatmul.mubr.bf16.gmra.mxu0 %v239
    %v341 = vpop.f32.mrf.mxu0
    %v342 = vadd.f32 0.0, %v341
    %v343 = vpop.f32.mrf.mxu0
    %v344 = vpop.f32.mrf.mxu0
    %v345 = vadd.f32 0.0, %v344
    %v346 = vpop.f32.mrf.mxu0
    %347 = vmatprep.mubr.bf16.mxu0 0
    %348 = vmatmul.mubr.bf16.gmra.mxu0 %v240
    %v349 = vpop.f32.mrf.mxu0
    %v350 = vadd.f32 0.0, %v349
    %v351 = vpop.f32.mrf.mxu0
    %v352 = vpop.f32.mrf.mxu0
    %v353 = vadd.f32 0.0, %v352
    %v354 = vpop.f32.mrf.mxu0
    %355 = vmatprep.mubr.bf16.mxu0 0
    %356 = vmatmul.mubr.bf16.gmra.mxu0 %v241
    %v357 = vpop.f32.mrf.mxu0
    %v358 = vadd.f32 0.0, %v357
    %v359 = vpop.f32.mrf.mxu0
    %v360 = vpop.f32.mrf.mxu0
    %v361 = vadd.f32 0.0, %v360
    %v362 = vpop.f32.mrf.mxu0
    %363 = vmatprep.mubr.bf16.mxu0 0
    %364 = vmatmul.mubr.bf16.gmra.mxu0 %v242
    %v365 = vpop.f32.mrf.mxu0
    %v366 = vadd.f32 0.0, %v365
    %v367 = vpop.f32.mrf.mxu0
    %v368 = vpop.f32.mrf.mxu0
    %v369 = vadd.f32 0.0, %v368
    %v370 = vpop.f32.mrf.mxu0
    %371 = vdwg.mxu0
    %v372 = vadd.f32 %v231, %v342
    %v373 = vadd.f32 %v232, %v345
    %v374 = vadd.f32 %v233, %v350
    %v375 = vadd.f32 %v234, %v353
    %v376 = vadd.f32 %v235, %v358
    %v377 = vadd.f32 %v236, %v361
    %v378 = vadd.f32 %v237, %v366
    %v379 = vadd.f32 %v238, %v369
    %380 = vst [vmem:[#allocation2] sm:$0xff] %v372
    %381 = vst [vmem:[#allocation2 + $0x8] sm:$0xff] %v373
    %382 = vst [vmem:[#allocation2 + $0x10] sm:$0xff] %v374
    %383 = vst [vmem:[#allocation2 + $0x18] sm:$0xff] %v375
    %384 = vst [vmem:[#allocation2 + $0x20] sm:$0xff] %v376
    %385 = vst [vmem:[#allocation2 + $0x28] sm:$0xff] %v377
    %386 = vst [vmem:[#allocation2 + $0x30] sm:$0xff] %v378
    %387 = vst [vmem:[#allocation2 + $0x38] sm:$0xff] %v379
    // Predicated region
    $region38: #{tpu_custom_call.1} parent=1 // pred_check
      %p388 = pneg %p63
    $region39: #{tpu_custom_call.1} parent=1 // pred_check_branch
      %390 = sbr.rel (%p388) target = $region41
    $region40: #{tpu_custom_call.1} parent=1 // pred_region
      %v391 = vld [vmem:[#allocation2] sm:$0xff]
      %v392 = vld [vmem:[#allocation2 + $0x8] sm:$0xff]
      %v393 = vld [vmem:[#allocation2 + $0x10] sm:$0xff]
      %v394 = vld [vmem:[#allocation2 + $0x18] sm:$0xff]
      %v395 = vld [vmem:[#allocation2 + $0x20] sm:$0xff]
      %v396 = vld [vmem:[#allocation2 + $0x28] sm:$0xff]
      %v397 = vld [vmem:[#allocation2 + $0x30] sm:$0xff]
      %v398 = vld [vmem:[#allocation2 + $0x38] sm:$0xff]
      %v399 = vld [vmem:[%s4] sm:$0x1]
      %v401 = vlaneseq
      %v402 = vshrl.u32 %v401, 7
      %v403 = vsub.s32 0, %v402
      %v404 = vrot.slane %v399, %v403
      %v406 = vadd.f32 %v391, %v404
      %v407 = vadd.f32 %v392, %v404
      %v408 = vadd.f32 %v393, %v404
      %v409 = vadd.f32 %v394, %v404
      %v410 = vadd.f32 %v395, %v404
      %v411 = vadd.f32 %v396, %v404
      %v412 = vadd.f32 %v397, %v404
      %v413 = vadd.f32 %v398, %v404
      %414 = vst [vmem:[#allocation9] sm:$0xff] %v406
      %415 = vst [vmem:[#allocation9 + $0x8] sm:$0xff] %v407
      %416 = vst [vmem:[#allocation9 + $0x10] sm:$0xff] %v408
      %417 = vst [vmem:[#allocation9 + $0x18] sm:$0xff] %v409
      %418 = vst [vmem:[#allocation9 + $0x20] sm:$0xff] %v410
      %419 = vst [vmem:[#allocation9 + $0x28] sm:$0xff] %v411
      %420 = vst [vmem:[#allocation9 + $0x30] sm:$0xff] %v412
      %421 = vst [vmem:[#allocation9 + $0x38] sm:$0xff] %v413
    $region41: #{tpu_custom_call.1} parent=1 // pred_fallthru
      _
    // Predicated region
    $region42: #{tpu_custom_call.1} parent=1 // pred_check
      _
    $region43: #{tpu_custom_call.1} parent=1 // pred_check_branch
      %423 = sbr.rel (0) target = $region45
    $region44: #{tpu_custom_call.1} parent=1 // pred_region
      %s425 = ssub.s32 1024, 1024
      %426 = vsyncadd [#allocation5], %s425
      %s427 = sshll.u32 [#allocation9], 4
      %s428 = int_to_ptr.vmem [resolvable:$true] %s427
      %433 = dma.vmem_to_hbm [thread:$0]  %s428, 1024, %s5, [#allocation5], 128, 128, 8
    $region45: #{tpu_custom_call.1} parent=1 // pred_fallthru
      _
    // Predicated region
    $region46: #{tpu_custom_call.1} parent=1 // pred_check
      _
    $region47: #{tpu_custom_call.1} parent=1 // pred_check_branch
      %435 = sbr.rel (0) target = $region49
    $region48: #{tpu_custom_call.1} parent=1 // pred_region
      %436 = dma.done [#allocation5], 1024
    $region49: #{tpu_custom_call.1} parent=1 // pred_fallthru
      _
    %437 = vsyncpa [#allocation4], 1
    %438 = vsyncpa [#allocation7], 1
    %439 = vsyncpa [#allocation5], 1

// kernel: tpu_custom_call.1
$region0: #{tpu_custom_call.1}
  #allocation0 [shape = 'u32[]', space=smem, size = 0x4, offset = 0x4, fixed_abs, tag = 'smem constant byte address 0x4 - core index']
  #allocation1 [shape = 'u32[144,128]{1,0:T(1,128)}', space=vmem, size = 0x12000, scoped, tag = 'internal scratch']
  #allocation2 [shape = 'f32[64,128]{1,0:T(8,128)}', space=vmem, size = 0x8000, scoped, tag = 'scratch operand']
  %s0 = inlined_call_operand.hbm [shape: f32[64,128], index: 0, kind: input, shape index: {}]
  %s1 = inlined_call_operand.hbm [shape: bf16[128,128], index: 1, kind: input, shape index: {}]
  %s2 = inlined_call_operand.vmem [shape: f32[1,128], index: 2, kind: input, shape index: {}]
  %s3 = inlined_call_operand.hbm [shape: bf16[128,128], index: 3, kind: input, shape index: {}]
  %s4 = inlined_call_operand.vmem [shape: f32[1,128], index: 4, kind: input, shape index: {}]
  %s5 = inlined_call_operand.hbm [shape: f32[64,128], index: 5, kind: output, shape index: {}]
  %s6 = sld [smem:[#allocation0]]
  $region50: #{tpu_custom_call.1} parent=0
    _
  %s8 = ssub.s32 1, %s6
  %s9 = scalar_select 0, %s8, %s6
  $region1: #{tpu_custom_call.1} parent=0
    #allocation3 [shape = 'u8[32768]{0}', space=vmem, size = 0x8000, scoped, tag = 'input window, operand 0, single buffered']
    #allocation4 [shape = 's32[1]{0}', space=sflag, size = 0x4, scoped, tag = 'scoped memory for tpu_custom_call.1']
    #allocation5 [shape = 's32[1]{0}', space=sflag, size = 0x4, scoped, tag = 'scoped memory for tpu_custom_call.1']
    #allocation6 [shape = 'u8[32768]{0}', space=vmem, size = 0x8000, scoped, tag = 'input window, operand 1, single buffered']
    #allocation7 [shape = 's32[1]{0}', space=sflag, size = 0x4, scoped, tag = 'scoped memory for tpu_custom_call.1']
    #allocation8 [shape = 'u8[32768]{0}', space=vmem, size = 0x8000, scoped, tag = 'input window, operand 3, single buffered']
    #allocation9 [shape = 'u8[32768]{0}', space=vmem, size = 0x8000, scoped, tag = 'output window, operand 0, single buffered']
    %10 = vsyncpa [#allocation4], 0
    %11 = vsyncpa [#allocation7], 0
    %12 = vsyncpa [#allocation5], 0
    // Predicated region
    $region2: #{tpu_custom_call.1} parent=1 // pred_check
      _
    $region3: #{tpu_custom_call.1} parent=1 // pred_check_branch
      %14 = sbr.rel (0) target = $region5
    $region4: #{tpu_custom_call.1} parent=1 // pred_region
      %s16 = ssub.s32 1024, 1024
      %17 = vsyncadd [#allocation4], %s16
      %s18 = sshll.u32 [#allocation3], 4
      %s19 = int_to_ptr.vmem [resolvable:$true] %s18
      %24 = dma.hbm_to_vmem [thread:$0]  %s0, 1024, %s19, [#allocation4], 128, 128, 8
    $region5: #{tpu_custom_call.1} parent=1 // pred_fallthru
      _
    // Predicated region
    $region6: #{tpu_custom_call.1} parent=1 // pred_check
      _
    $region7: #{tpu_custom_call.1} parent=1 // pred_check_branch
      %26 = sbr.rel (0) target = $region9
    $region8: #{tpu_custom_call.1} parent=1 // pred_region
      %s28 = ssub.s32 1024, 1024
      %29 = vsyncadd [#allocation7], %s28
      %s30 = sshll.u32 [#allocation6], 4
      %s31 = int_to_ptr.vmem [resolvable:$true] %s30
      %36 = dma.hbm_to_vmem [thread:$0]  %s1, 1024, %s31, [#allocation7], 64, 64, 4
    $region9: #{tpu_custom_call.1} parent=1 // pred_fallthru
      _
    // Predicated region
    $region10: #{tpu_custom_call.1} parent=1 // pred_check
      _
    $region11: #{tpu_custom_call.1} parent=1 // pred_check_branch
      %38 = sbr.rel (0) target = $region13
    $region12: #{tpu_custom_call.1} parent=1 // pred_region
      _
    $region13: #{tpu_custom_call.1} parent=1 // pred_fallthru
      _
    // Predicated region
    $region14: #{tpu_custom_call.1} parent=1 // pred_check
      _
    $region15: #{tpu_custom_call.1} parent=1 // pred_check_branch
      %40 = sbr.rel (0) target = $region17
    $region16: #{tpu_custom_call.1} parent=1 // pred_region
      %s42 = ssub.s32 1024, 1024
      %43 = vsyncadd [#allocation7], %s42
      %s44 = sshll.u32 [#allocation8], 4
      %s45 = int_to_ptr.vmem [resolvable:$true] %s44
      %50 = dma.hbm_to_vmem [thread:$0]  %s3, 1024, %s45, [#allocation7], 64, 64, 4
    $region17: #{tpu_custom_call.1} parent=1 // pred_fallthru
      _
    // Predicated region
    $region18: #{tpu_custom_call.1} parent=1 // pred_check
      _
    $region19: #{tpu_custom_call.1} parent=1 // pred_check_branch
      %52 = sbr.rel (0) target = $region21
    $region20: #{tpu_custom_call.1} parent=1 // pred_region
      _
    $region21: #{tpu_custom_call.1} parent=1 // pred_fallthru
      _
    // Predicated region
    $region22: #{tpu_custom_call.1} parent=1 // pred_check
      _
    $region23: #{tpu_custom_call.1} parent=1 // pred_check_branch
      %54 = sbr.rel (0) target = $region25
    $region24: #{tpu_custom_call.1} parent=1 // pred_region
      %55 = dma.done [#allocation4], 1024
    $region25: #{tpu_custom_call.1} parent=1 // pred_fallthru
      _
    // Predicated region
    $region26: #{tpu_custom_call.1} parent=1 // pred_check
      _
    $region27: #{tpu_custom_call.1} parent=1 // pred_check_branch
      %57 = sbr.rel (0) target = $region29
    $region28: #{tpu_custom_call.1} parent=1 // pred_region
      %58 = dma.done [#allocation7], 1024
    $region29: #{tpu_custom_call.1} parent=1 // pred_fallthru
      _
    // Predicated region
    $region30: #{tpu_custom_call.1} parent=1 // pred_check
      _
    $region31: #{tpu_custom_call.1} parent=1 // pred_check_branch
      %60 = sbr.rel (0) target = $region33
    $region32: #{tpu_custom_call.1} parent=1 // pred_region
      %61 = dma.done [#allocation7], 1024
    $region33: #{tpu_custom_call.1} parent=1 // pred_fallthru
      _
    %p63 = scmp.eq.s32.totalorder 0, 0
    // Predicated region
    $region34: #{tpu_custom_call.1} parent=1 // pred_check
      %p64 = pneg %p63
    $region35: #{tpu_custom_call.1} parent=1 // pred_check_branch
      %66 = sbr.rel (%p64) target = $region37
    $region36: #{tpu_custom_call.1} parent=1 // pred_region
      %67 = vst [vmem:[#allocation2] sm:$0xff] 0.0
      %68 = vst [vmem:[#allocation2 + $0x8] sm:$0xff] 0.0
      %69 = vst [vmem:[#allocation2 + $0x10] sm:$0xff] 0.0
      %70 = vst [vmem:[#allocation2 + $0x18] sm:$0xff] 0.0
      %71 = vst [vmem:[#allocation2 + $0x20] sm:$0xff] 0.0
      %72 = vst [vmem:[#allocation2 + $0x28] sm:$0xff] 0.0
      %73 = vst [vmem:[#allocation2 + $0x30] sm:$0xff] 0.0
      %74 = vst [vmem:[#allocation2 + $0x38] sm:$0xff] 0.0
    $region37: #{tpu_custom_call.1} parent=1 // pred_fallthru
      _
    %v75 = vld [vmem:[#allocation3] sm:$0xff]
    %v76 = vld [vmem:[#allocation3 + $0x8] sm:$0xff]
    %v77 = vld [vmem:[#allocation3 + $0x10] sm:$0xff]
    %v78 = vld [vmem:[#allocation3 + $0x18] sm:$0xff]
    %v79 = vld [vmem:[#allocation3 + $0x20] sm:$0xff]
    %v80 = vld [vmem:[#allocation3 + $0x28] sm:$0xff]
    %v81 = vld [vmem:[#allocation3 + $0x30] sm:$0xff]
    %v82 = vld [vmem:[#allocation3 + $0x38] sm:$0xff]
    %v83 = vpack.c.bf16 %v76, %v75
    %v84 = vpack.c.bf16 %v78, %v77
    %v85 = vpack.c.bf16 %v80, %v79
    %v86 = vpack.c.bf16 %v82, %v81
    %v87 = vld [vmem:[#allocation6] sm:$0xf]
    %v88 = vld [vmem:[#allocation6 + $0x4] sm:$0xf]
    %v89 = vld [vmem:[#allocation6 + $0x8] sm:$0xf]
    %v90 = vld [vmem:[#allocation6 + $0xc] sm:$0xf]
    %v91 = vld [vmem:[#allocation6 + $0x10] sm:$0xf]
    %v92 = vld [vmem:[#allocation6 + $0x14] sm:$0xf]
    %v93 = vld [vmem:[#allocation6 + $0x18] sm:$0xf]
    %v94 = vld [vmem:[#allocation6 + $0x1c] sm:$0xf]
    %v95 = vld [vmem:[#allocation6 + $0x20] sm:$0xf]
    %v96 = vld [vmem:[#allocation6 + $0x24] sm:$0xf]
    %v97 = vld [vmem:[#allocation6 + $0x28] sm:$0xf]
    %v98 = vld [vmem:[#allocation6 + $0x2c] sm:$0xf]
    %v99 = vld [vmem:[#allocation6 + $0x30] sm:$0xf]
    %v100 = vld [vmem:[#allocation6 + $0x34] sm:$0xf]
    %v101 = vld [vmem:[#allocation6 + $0x38] sm:$0xf]
    %v102 = vld [vmem:[#allocation6 + $0x3c] sm:$0xf]
    %v103 = vld [vmem:[%s2] sm:$0x1]
    %v105 = vlaneseq
    %v106 = vshrl.u32 %v105, 7
    %v107 = vsub.s32 0, %v106
    %v108 = vrot.slane %v103, %v107
    %v126 = vunpack.c.l.b16 %v87
    %v127 = vunpack.c.l.b16 %v88
    %v128 = vunpack.c.l.b16 %v89
    %v129 = vunpack.c.l.b16 %v90
    %v130 = vunpack.c.l.b16 %v91
    %v131 = vunpack.c.l.b16 %v92
    %v132 = vunpack.c.l.b16 %v93
    %v133 = vunpack.c.l.b16 %v94
    %v134 = vunpack.c.l.b16 %v95
    %v135 = vunpack.c.l.b16 %v96
    %v136 = vunpack.c.l.b16 %v97
    %v137 = vunpack.c.l.b16 %v98
    %v138 = vunpack.c.l.b16 %v99
    %v139 = vunpack.c.l.b16 %v100
    %v140 = vunpack.c.l.b16 %v101
    %v141 = vunpack.c.l.b16 %v102
    %v142 = vpack.c.b16 %v127, %v126
    %v143 = vpack.c.b16 %v129, %v128
    %v144 = vpack.c.b16 %v131, %v130
    %v145 = vpack.c.b16 %v133, %v132
    %v146 = vpack.c.b16 %v135, %v134
    %v147 = vpack.c.b16 %v137, %v136
    %v148 = vpack.c.b16 %v139, %v138
    %v149 = vpack.c.b16 %v141, %v140
    %158 = vmatprep.subr.bf16.mxu0 0
    %159 = vmatpush1.bf16.msra.mxu0 %v149
    %160 = vmatprep.subr.bf16.mxu0 0
    %161 = vmatpush1.bf16.msra.mxu0 %v148
    %162 = vmatprep.subr.bf16.mxu0 0
    %163 = vmatpush1.bf16.msra.mxu0 %v147
    %164 = vmatprep.subr.bf16.mxu0 0
    %165 = vmatpush1.bf16.msra.mxu0 %v146
    %166 = vmatprep.subr.bf16.mxu0 0
    %167 = vmatpush1.bf16.msra.mxu0 %v145
    %168 = vmatprep.subr.bf16.mxu0 0
    %169 = vmatpush1.bf16.msra.mxu0 %v144
    %170 = vmatprep.subr.bf16.mxu0 0
    %171 = vmatpush1.bf16.msra.mxu0 %v143
    %172 = vmatprep.subr.bf16.mxu0 0
    %173 = vmatpush1.bf16.msra.mxu0 %v142
    %174 = vmatprep.subr.bf16.mxu0 0
    %175 = vmatpush2.bf16.msra.mxu0 0
    %176 = vmatprep.subr.bf16.mxu0 0
    %177 = vmatpush2.bf16.msra.mxu0 0
    %178 = vmatprep.subr.bf16.mxu0 0
    %179 = vmatpush2.bf16.msra.mxu0 0
    %180 = vmatprep.subr.bf16.mxu0 0
    %181 = vmatpush2.bf16.msra.mxu0 0
    %182 = vmatprep.subr.bf16.mxu0 0
    %183 = vmatpush2.bf16.msra.mxu0 0
    %184 = vmatprep.subr.bf16.mxu0 0
    %185 = vmatpush2.bf16.msra.mxu0 0
    %186 = vmatprep.subr.bf16.mxu0 0
    %187 = vmatpush2.bf16.msra.mxu0 0
    %188 = vmatprep.subr.bf16.mxu0 0
    %189 = vmatpush2.bf16.msra.mxu0 0
    %190 = vmatprep.mubr.bf16.mxu0 0
    %191 = vmatmul.mubr.bf16.gmra.mxu0 %v83
    %v192 = vpop.f32.mrf.mxu0
    %v193 = vadd.f32 %v108, %v192
    %v194 = vpop.f32.mrf.mxu0
    %v195 = vpop.f32.mrf.mxu0
    %v196 = vadd.f32 %v108, %v195
    %v197 = vpop.f32.mrf.mxu0
    %198 = vmatprep.mubr.bf16.mxu0 0
    %199 = vmatmul.mubr.bf16.gmra.mxu0 %v84
    %v200 = vpop.f32.mrf.mxu0
    %v201 = vadd.f32 %v108, %v200
    %v202 = vpop.f32.mrf.mxu0
    %v203 = vpop.f32.mrf.mxu0
    %v204 = vadd.f32 %v108, %v203
    %v205 = vpop.f32.mrf.mxu0
    %206 = vmatprep.mubr.bf16.mxu0 0
    %207 = vmatmul.mubr.bf16.gmra.mxu0 %v85
    %v208 = vpop.f32.mrf.mxu0
    %v209 = vadd.f32 %v108, %v208
    %v210 = vpop.f32.mrf.mxu0
    %v211 = vpop.f32.mrf.mxu0
    %v212 = vadd.f32 %v108, %v211
    %v213 = vpop.f32.mrf.mxu0
    %214 = vmatprep.mubr.bf16.mxu0 0
    %215 = vmatmul.mubr.bf16.gmra.mxu0 %v86
    %v216 = vpop.f32.mrf.mxu0
    %v217 = vadd.f32 %v108, %v216
    %v218 = vpop.f32.mrf.mxu0
    %v219 = vpop.f32.mrf.mxu0
    %v220 = vadd.f32 %v108, %v219
    %v221 = vpop.f32.mrf.mxu0
    %222 = vdwg.mxu0
    %v223 = vmax.f32 %v193, 0.0
    %v224 = vmax.f32 %v196, 0.0
    %v225 = vmax.f32 %v201, 0.0
    %v226 = vmax.f32 %v204, 0.0
    %v227 = vmax.f32 %v209, 0.0
    %v228 = vmax.f32 %v212, 0.0
    %v229 = vmax.f32 %v217, 0.0
    %v230 = vmax.f32 %v220, 0.0
    %v231 = vld [vmem:[#allocation2] sm:$0xff]
    %v232 = vld [vmem:[#allocation2 + $0x8] sm:$0xff]
    %v233 = vld [vmem:[#allocation2 + $0x10] sm:$0xff]
    %v234 = vld [vmem:[#allocation2 + $0x18] sm:$0xff]
    %v235 = vld [vmem:[#allocation2 + $0x20] sm:$0xff]
    %v236 = vld [vmem:[#allocation2 + $0x28] sm:$0xff]
    %v237 = vld [vmem:[#allocation2 + $0x30] sm:$0xff]
    %v238 = vld [vmem:[#allocation2 + $0x38] sm:$0xff]
    %v239 = vpack.c.bf16 %v224, %v223
    %v240 = vpack.c.bf16 %v226, %v225
    %v241 = vpack.c.bf16 %v228, %v227
    %v242 = vpack.c.bf16 %v230, %v229
    %v243 = vld [vmem:[#allocation8] sm:$0xf]
    %v244 = vld [vmem:[#allocation8 + $0x4] sm:$0xf]
    %v245 = vld [vmem:[#allocation8 + $0x8] sm:$0xf]
    %v246 = vld [vmem:[#allocation8 + $0xc] sm:$0xf]
    %v247 = vld [vmem:[#allocation8 + $0x10] sm:$0xf]
    %v248 = vld [vmem:[#allocation8 + $0x14] sm:$0xf]
    %v249 = vld [vmem:[#allocation8 + $0x18] sm:$0xf]
    %v250 = vld [vmem:[#allocation8 + $0x1c] sm:$0xf]
    %v251 = vld [vmem:[#allocation8 + $0x20] sm:$0xf]
    %v252 = vld [vmem:[#allocation8 + $0x24] sm:$0xf]
    %v253 = vld [vmem:[#allocation8 + $0x28] sm:$0xf]
    %v254 = vld [vmem:[#allocation8 + $0x2c] sm:$0xf]
    %v255 = vld [vmem:[#allocation8 + $0x30] sm:$0xf]
    %v256 = vld [vmem:[#allocation8 + $0x34] sm:$0xf]
    %v257 = vld [vmem:[#allocation8 + $0x38] sm:$0xf]
    %v258 = vld [vmem:[#allocation8 + $0x3c] sm:$0xf]
    %v275 = vunpack.c.l.b16 %v243
    %v276 = vunpack.c.l.b16 %v244
    %v277 = vunpack.c.l.b16 %v245
    %v278 = vunpack.c.l.b16 %v246
    %v279 = vunpack.c.l.b16 %v247
    %v280 = vunpack.c.l.b16 %v248
    %v281 = vunpack.c.l.b16 %v249
    %v282 = vunpack.c.l.b16 %v250
    %v283 = vunpack.c.l.b16 %v251
    %v284 = vunpack.c.l.b16 %v252
    %v285 = vunpack.c.l.b16 %v253
    %v286 = vunpack.c.l.b16 %v254
    %v287 = vunpack.c.l.b16 %v255
    %v288 = vunpack.c.l.b16 %v256
    %v289 = vunpack.c.l.b16 %v257
    %v290 = vunpack.c.l.b16 %v258
    %v291 = vpack.c.b16 %v276, %v275
    %v292 = vpack.c.b16 %v278, %v277
    %v293 = vpack.c.b16 %v280, %v279
    %v294 = vpack.c.b16 %v282, %v281
    %v295 = vpack.c.b16 %v284, %v283
    %v296 = vpack.c.b16 %v286, %v285
    %v297 = vpack.c.b16 %v288, %v287
    %v298 = vpack.c.b16 %v290, %v289
    %307 = vmatprep.subr.bf16.mxu0 0
    %308 = vmatpush1.bf16.msra.mxu0 %v298
    %309 = vmatprep.subr.bf16.mxu0 0
    %310 = vmatpush1.bf16.msra.mxu0 %v297
    %311 = vmatprep.subr.bf16.mxu0 0
    %312 = vmatpush1.bf16.msra.mxu0 %v296
    %313 = vmatprep.subr.bf16.mxu0 0
    %314 = vmatpush1.bf16.msra.mxu0 %v295
    %315 = vmatprep.subr.bf16.mxu0 0
    %316 = vmatpush1.bf16.msra.mxu0 %v294
    %317 = vmatprep.subr.bf16.mxu0 0
    %318 = vmatpush1.bf16.msra.mxu0 %v293
    %319 = vmatprep.subr.bf16.mxu0 0
    %320 = vmatpush1.bf16.msra.mxu0 %v292
    %321 = vmatprep.subr.bf16.mxu0 0
    %322 = vmatpush1.bf16.msra.mxu0 %v291
    %323 = vmatprep.subr.bf16.mxu0 0
    %324 = vmatpush2.bf16.msra.mxu0 0
    %325 = vmatprep.subr.bf16.mxu0 0
    %326 = vmatpush2.bf16.msra.mxu0 0
    %327 = vmatprep.subr.bf16.mxu0 0
    %328 = vmatpush2.bf16.msra.mxu0 0
    %329 = vmatprep.subr.bf16.mxu0 0
    %330 = vmatpush2.bf16.msra.mxu0 0
    %331 = vmatprep.subr.bf16.mxu0 0
    %332 = vmatpush2.bf16.msra.mxu0 0
    %333 = vmatprep.subr.bf16.mxu0 0
    %334 = vmatpush2.bf16.msra.mxu0 0
    %335 = vmatprep.subr.bf16.mxu0 0
    %336 = vmatpush2.bf16.msra.mxu0 0
    %337 = vmatprep.subr.bf16.mxu0 0
    %338 = vmatpush2.bf16.msra.mxu0 0
    %339 = vmatprep.mubr.bf16.mxu0 0
    %340 = vmatmul.mubr.bf16.gmra.mxu0 %v239
    %v341 = vpop.f32.mrf.mxu0
    %v342 = vadd.f32 0.0, %v341
    %v343 = vpop.f32.mrf.mxu0
    %v344 = vpop.f32.mrf.mxu0
    %v345 = vadd.f32 0.0, %v344
    %v346 = vpop.f32.mrf.mxu0
    %347 = vmatprep.mubr.bf16.mxu0 0
    %348 = vmatmul.mubr.bf16.gmra.mxu0 %v240
    %v349 = vpop.f32.mrf.mxu0
    %v350 = vadd.f32 0.0, %v349
    %v351 = vpop.f32.mrf.mxu0
    %v352 = vpop.f32.mrf.mxu0
    %v353 = vadd.f32 0.0, %v352
    %v354 = vpop.f32.mrf.mxu0
    %355 = vmatprep.mubr.bf16.mxu0 0
    %356 = vmatmul.mubr.bf16.gmra.mxu0 %v241
    %v357 = vpop.f32.mrf.mxu0
    %v358 = vadd.f32 0.0, %v357
    %v359 = vpop.f32.mrf.mxu0
    %v360 = vpop.f32.mrf.mxu0
    %v361 = vadd.f32 0.0, %v360
    %v362 = vpop.f32.mrf.mxu0
    %363 = vmatprep.mubr.bf16.mxu0 0
    %364 = vmatmul.mubr.bf16.gmra.mxu0 %v242
    %v365 = vpop.f32.mrf.mxu0
    %v366 = vadd.f32 0.0, %v365
    %v367 = vpop.f32.mrf.mxu0
    %v368 = vpop.f32.mrf.mxu0
    %v369 = vadd.f32 0.0, %v368
    %v370 = vpop.f32.mrf.mxu0
    %371 = vdwg.mxu0
    %v372 = vadd.f32 %v231, %v342
    %v373 = vadd.f32 %v232, %v345
    %v374 = vadd.f32 %v233, %v350
    %v375 = vadd.f32 %v234, %v353
    %v376 = vadd.f32 %v235, %v358
    %v377 = vadd.f32 %v236, %v361
    %v378 = vadd.f32 %v237, %v366
    %v379 = vadd.f32 %v238, %v369
    %380 = vst [vmem:[#allocation2] sm:$0xff] %v372
    %381 = vst [vmem:[#allocation2 + $0x8] sm:$0xff] %v373
    %382 = vst [vmem:[#allocation2 + $0x10] sm:$0xff] %v374
    %383 = vst [vmem:[#allocation2 + $0x18] sm:$0xff] %v375
    %384 = vst [vmem:[#allocation2 + $0x20] sm:$0xff] %v376
    %385 = vst [vmem:[#allocation2 + $0x28] sm:$0xff] %v377
    %386 = vst [vmem:[#allocation2 + $0x30] sm:$0xff] %v378
    %387 = vst [vmem:[#allocation2 + $0x38] sm:$0xff] %v379
    // Predicated region
    $region38: #{tpu_custom_call.1} parent=1 // pred_check
      %p388 = pneg %p63
    $region39: #{tpu_custom_call.1} parent=1 // pred_check_branch
      %390 = sbr.rel (%p388) target = $region41
    $region40: #{tpu_custom_call.1} parent=1 // pred_region
      %v391 = vld [vmem:[#allocation2] sm:$0xff]
      %v392 = vld [vmem:[#allocation2 + $0x8] sm:$0xff]
      %v393 = vld [vmem:[#allocation2 + $0x10] sm:$0xff]
      %v394 = vld [vmem:[#allocation2 + $0x18] sm:$0xff]
      %v395 = vld [vmem:[#allocation2 + $0x20] sm:$0xff]
      %v396 = vld [vmem:[#allocation2 + $0x28] sm:$0xff]
      %v397 = vld [vmem:[#allocation2 + $0x30] sm:$0xff]
      %v398 = vld [vmem:[#allocation2 + $0x38] sm:$0xff]
      %v399 = vld [vmem:[%s4] sm:$0x1]
      %v401 = vlaneseq
      %v402 = vshrl.u32 %v401, 7
      %v403 = vsub.s32 0, %v402
      %v404 = vrot.slane %v399, %v403
      %v406 = vadd.f32 %v391, %v404
      %v407 = vadd.f32 %v392, %v404
      %v408 = vadd.f32 %v393, %v404
      %v409 = vadd.f32 %v394, %v404
      %v410 = vadd.f32 %v395, %v404
      %v411 = vadd.f32 %v396, %v404
      %v412 = vadd.f32 %v397, %v404
      %v413 = vadd.f32 %v398, %v404
      %414 = vst [vmem:[#allocation9] sm:$0xff] %v406
      %415 = vst [vmem:[#allocation9 + $0x8] sm:$0xff] %v407
      %416 = vst [vmem:[#allocation9 + $0x10] sm:$0xff] %v408
      %417 = vst [vmem:[#allocation9 + $0x18] sm:$0xff] %v409
      %418 = vst [vmem:[#allocation9 + $0x20] sm:$0xff] %v410
      %419 = vst [vmem:[#allocation9 + $0x28] sm:$0xff] %v411
      %420 = vst [vmem:[#allocation9 + $0x30] sm:$0xff] %v412
      %421 = vst [vmem:[#allocation9 + $0x38] sm:$0xff] %v413
    $region41: #{tpu_custom_call.1} parent=1 // pred_fallthru
      _
    // Predicated region
    $region42: #{tpu_custom_call.1} parent=1 // pred_check
      _
    $region43: #{tpu_custom_call.1} parent=1 // pred_check_branch
      %423 = sbr.rel (0) target = $region45
    $region44: #{tpu_custom_call.1} parent=1 // pred_region
      %s425 = ssub.s32 1024, 1024
      %426 = vsyncadd [#allocation5], %s425
      %s427 = sshll.u32 [#allocation9], 4
      %s428 = int_to_ptr.vmem [resolvable:$true] %s427
      %433 = dma.vmem_to_hbm [thread:$0]  %s428, 1024, %s5, [#allocation5], 128, 128, 8
    $region45: #{tpu_custom_call.1} parent=1 // pred_fallthru
      _
    // Predicated region
    $region46: #{tpu_custom_call.1} parent=1 // pred_check
      _
    $region47: #{tpu_custom_call.1} parent=1 // pred_check_branch
      %435 = sbr.rel (0) target = $region49
    $region48: #{tpu_custom_call.1} parent=1 // pred_region
      %436 = dma.done [#allocation5], 1024
    $region49: #{tpu_custom_call.1} parent=1 // pred_fallthru
      _
    %437 = vsyncpa [#allocation4], 1
    %438 = vsyncpa [#allocation7], 1
    %439 = vsyncpa [#allocation5], 1

</llo_original>
